<compile_context>
chip_gen: v7x
topology: tpu7x:2x2x1
jax: 0.10.0
libtpu: 0.0.40
codegen_flags: <defaults>
</compile_context>

<pallas_src>
import functools
import math

import numpy as np

import jax
import jax.numpy as jnp
from jax.experimental import pallas as pl
from jax.experimental.pallas import tpu as pltpu

NUM_CLASSES = 10
FREQPTS = 64                           # inferred: fc3 takes 4*160 features after two /2 pools
SEQ_LEN = NUM_CLASSES * FREQPTS        # 640
KSIZE = 5
PAD = 2
LEAKY_SLOPE = 0.01                     # F.leaky_relu default negative_slope
CONV_CHANNELS = ((1, 2), (2, 2), (2, 4), (4, 4))   # (Cin, Cout) for conv1..conv4

L_HALF = SEQ_LEN // 2                  # 320: valid length after pool1
L_HALF_PAD = 384                       # 320 rounded up to a lane-tile multiple (128)
L_QUART = SEQ_LEN // 4                 # 160: valid length after pool2 (fc3 width per channel)
OUT_PAD = 128                          # logits padded to one full lane tile (dense vst)


# ---------------------------------------------------------------------------
# pltpu.roll direction probe (one tiny kernel, run once before building the net).
# A mis-detection cannot slip through: the __main__ block asserts against the
# plain-JAX reference.
# ---------------------------------------------------------------------------
def _detect_roll_toward_higher():
    """True if pltpu.roll(x, +1) moves x[i] to index i+1 (jnp.roll convention)."""
    def probe_kernel(x_ref, o_ref):
        o_ref[...] = pltpu.roll(x_ref[...], shift=1, axis=1)

    x = jnp.broadcast_to(jnp.arange(128, dtype=jnp.float32), (8, 128))
    y = pl.pallas_call(
        probe_kernel,
        out_shape=jax.ShapeDtypeStruct((8, 128), jnp.float32),
        in_specs=[pl.BlockSpec(memory_space=pltpu.MemorySpace.VMEM)],
        out_specs=pl.BlockSpec(memory_space=pltpu.MemorySpace.VMEM),
    )(x)
    return bool(np.asarray(y)[0, 0] > 64.0)


# ---------------------------------------------------------------------------
# Fused forward kernel
# ---------------------------------------------------------------------------
def _fused_kernel(x_ref,
                  w1_ref, b1_ref, w2_ref, b2_ref, w3_ref, b3_ref, w4_ref, b4_ref,
                  wf_ref, bf_ref, s1e_ref,
                  o_ref, *, roll_toward_higher):
    bt = x_ref.shape[0]

    def roll_shift(v, d):
        # Unmasked circular shift: y[:, l] = v[:, (l + d) mod L]  (XLU).
        L = v.shape[1]
        amt = ((-d) if roll_toward_higher else d) % L
        return pltpu.roll(v, shift=amt, axis=1)

    # Hoisted boundary masks for the 640-long stage (JAX does not CSE iota/where).
    lane640 = jax.lax.broadcasted_iota(jnp.int32, (bt, SEQ_LEN), 1)
    edge_masks = {d: (lane640 < SEQ_LEN - d) if d > 0 else (lane640 >= -d)
                  for d in (-2, -1, 1, 2)}

    def conv_lrelu(chans, w_ref, b_ref, cin, cout, masks):
        # 'same' conv (k=5) + leaky_relu.  Channel contraction stays on the VPU with
        # SMEM scalar weights: with Cin,Cout <= 4 an MXU matmul per tap is pure latency.
        L = chans[0].shape[1]
        accs = [jnp.full((bt, L), b_ref[o], jnp.float32) for o in range(cout)]
        for c in range(cin):
            for k in range(KSIZE):
                d = k - PAD
                if d == 0:
                    xs = chans[c]
                else:
                    xs = roll_shift(chans[c], d)
                    if masks is not None:
                        xs = jnp.where(masks[d], xs, 0.0)
                for o in range(cout):
                    accs[o] = accs[o] + xs * w_ref[(o * cin + c) * KSIZE + k]
        # leaky_relu as max(a, slope*a): 2 VALU ops instead of cmp+mul+select.
        return [jnp.maximum(a, LEAKY_SLOPE * a) for a in accs]

    def premax(h):
        # m[:, 2j] = max(h[:, 2j], h[:, 2j+1]); odd / wrapped lanes are never selected
        # downstream (even selector / zero weight rows), so no mask is needed.
        return jnp.maximum(h, roll_shift(h, 1))

    # conv1, conv2 on 640 lanes (whole sequence valid -> boundary masks needed).
    h = conv_lrelu([x_ref[...]], w1_ref, b1_ref, *CONV_CHANNELS[0], edge_masks)
    h = conv_lrelu(h, w2_ref, b2_ref, *CONV_CHANNELS[1], edge_masks)

    # pool1: pre-max + ONE even-selector matmul, channels stacked along sublanes.
    stacked = jnp.concatenate([premax(c) for c in h], axis=0)                 # (2*bt, 640)
    pooled = jnp.dot(stacked, s1e_ref[...], preferred_element_type=jnp.float32)  # (2*bt, 384)
    h = [pooled[i * bt:(i + 1) * bt, :] for i in range(CONV_CHANNELS[1][1])]  # tail lanes = 0

    # conv3, conv4 on 384-padded lanes (320 valid).  Input tails are exactly zero, so
    # rolls of +-1/+-2 only wrap zeros across both the 320 and 384 boundaries: no
    # per-tap masks.  Only conv3's output tail is re-zeroed because conv4 taps it.
    h = conv_lrelu(h, w3_ref, b3_ref, *CONV_CHANNELS[2], None)
    lane384 = jax.lax.broadcasted_iota(jnp.int32, (bt, L_HALF_PAD), 1)
    valid384 = lane384 < L_HALF
    h = [jnp.where(valid384, c, 0.0) for c in h]
    h = conv_lrelu(h, w4_ref, b4_ref, *CONV_CHANNELS[3], None)

    # TODO(synk): F.dropout(p=0.5, training=True) in the torch forward is stochastic;
    # implemented as identity (inference semantics) since torch RNG cannot be reproduced.

    # pool2 folded into fc3: y = sum_c premax(h4[c]) @ W'_c where W'_c[2j,:] = Wf[:, c*160+j]
    # and odd / tail / pad-lane rows are zero (host-precomputed).  Output is a full
    # 128-lane slab so the final store is an unmasked vst.
    y = bf_ref[...]
    for c in range(CONV_CHANNELS[3][1]):
        y = y + jnp.dot(premax(h[c]), wf_ref[c], preferred_element_type=jnp.float32)
    o_ref[...] = y


# ---------------------------------------------------------------------------
# Wrapper
# ---------------------------------------------------------------------------
def _pick_batch_tile(batch):
    bp8 = ((batch + 7) // 8) * 8
    if bp8 >= 512:
        return 256        # v6e/v7x MXU M; still >=2 grid steps for v7x megacore
    if bp8 > 128:
        return 128        # v5e MXU M; keeps >=2 grid steps
    return bp8            # small batches: one grid step, no padded waste


def _even_selector(l_in, j_out):
    # 0/1 matrix: column j selects row 2j (columns with 2j >= l_in are all zero).
    l = jnp.arange(l_in, dtype=jnp.int32)[:, None]
    j = jnp.arange(j_out, dtype=jnp.int32)[None, :]
    return (l == 2 * j).astype(jnp.float32)


def make_forward(roll_toward_higher):
    kernel = functools.partial(_fused_kernel, roll_toward_higher=roll_toward_higher)

    def const_spec(shape):
        return pl.BlockSpec(shape, lambda i: (0,) * len(shape))

    smem = pl.BlockSpec(memory_space=pltpu.MemorySpace.SMEM)

    def forward(x, params):
        B = x.shape[0]
        # torch: x.view(-1, 1, classes * freqpts) -> NCW (B, 1, 640); Cin = 1, so 2-D (B, 640).
        xf = x.reshape(B, SEQ_LEN).astype(jnp.float32)
        bt = _pick_batch_tile(B)
        Bp = ((B + bt - 1) // bt) * bt
        if Bp != B:
            xf = jnp.pad(xf, ((0, Bp - B), (0, 0)))

        conv_w = [params["w%d" % i].reshape(-1).astype(jnp.float32) for i in range(1, 5)]
        conv_b = [params["b%d" % i].reshape(-1).astype(jnp.float32) for i in range(1, 5)]

        # fc3 weight (10, 640) -> per-channel (160, 10) -> pool2-folded (384, 128):
        # row 2j of W'_c is Wf[:, c*160 + j]; odd / tail / pad-lane rows are zero.
        cout4 = CONV_CHANNELS[3][1]
        wfc = (params["wf"].reshape(NUM_CLASSES, cout4, L_QUART)
               .transpose(1, 2, 0).astype(jnp.float32))                 # (4, 160, 10)
        wfold = jnp.zeros((cout4, L_HALF_PAD, OUT_PAD), jnp.float32)
        wfold = wfold.at[:, 0:L_HALF:2, :NUM_CLASSES].set(wfc)
        bfp = jnp.zeros((1, OUT_PAD), jnp.float32)
        bfp = bfp.at[0, :NUM_CLASSES].set(params["bf"].astype(jnp.float32))

        s1e = _even_selector(SEQ_LEN, L_HALF_PAD)                        # (640, 384)

        out = pl.pallas_call(
            kernel,
            out_shape=jax.ShapeDtypeStruct((Bp, OUT_PAD), jnp.float32),
            grid=(Bp // bt,),
            in_specs=[
                pl.BlockSpec((bt, SEQ_LEN), lambda i: (i, 0)),           # x (batch tiled)
                smem, smem, smem, smem, smem, smem, smem, smem,          # conv weights/biases
                const_spec(wfold.shape), const_spec(bfp.shape),
                const_spec(s1e.shape),
            ],
            out_specs=pl.BlockSpec((bt, OUT_PAD), lambda i: (i, 0)),
            compiler_params=pltpu.CompilerParams(
                dimension_semantics=("parallel",),
                vmem_limit_bytes=32 * 1024 * 1024),
        )(xf,
          conv_w[0], conv_b[0], conv_w[1], conv_b[1],
          conv_w[2], conv_b[2], conv_w[3], conv_b[3],
          wfold, bfp, s1e)
        return out[:B, :NUM_CLASSES]

    return forward


# ---------------------------------------------------------------------------
# Plain-JAX reference (independent implementation, for the correctness check)
# ---------------------------------------------------------------------------
def reference_forward(x, params):
    B = x.shape[0]
    h = x.reshape(B, 1, SEQ_LEN).astype(jnp.float32)
    dn = ("NCH", "OIH", "NCH")

    def conv(v, w, b):
        y = jax.lax.conv_general_dilated(
            v, w.astype(jnp.float32), window_strides=(1,), padding=[(PAD, PAD)],
            dimension_numbers=dn)
        return y + b.reshape(1, -1, 1).astype(jnp.float32)

    def lrelu(v):
        return jnp.where(v >= 0.0, v, LEAKY_SLOPE * v)

    def pool(v):
        return jnp.max(v.reshape(v.shape[0], v.shape[1], -1, 2), axis=-1)

    h = lrelu(conv(h, params["w1"], params["b1"]))
    h = pool(lrelu(conv(h, params["w2"], params["b2"])))
    h = lrelu(conv(h, params["w3"], params["b3"]))
    h = pool(lrelu(conv(h, params["w4"], params["b4"])))
    feat = h.reshape(B, -1)                      # torch.flatten(x, 1): (C, L) row-major
    return feat @ params["wf"].T.astype(jnp.float32) + params["bf"].astype(jnp.float32)


# ---------------------------------------------------------------------------
# Deterministic parameter init (shapes from DeepSenseEighth.__init__)
# ---------------------------------------------------------------------------
def init_params(key):
    def u(k, shape, fan_in):
        bound = 1.0 / math.sqrt(fan_in)
        return jax.random.uniform(k, shape, jnp.float32, -bound, bound)

    ks = jax.random.split(key, 10)
    p = {}
    p["w1"] = u(ks[0], (2, 1, KSIZE), 1 * KSIZE)
    p["b1"] = u(ks[1], (2,), 1 * KSIZE)
    p["w2"] = u(ks[2], (2, 2, KSIZE), 2 * KSIZE)
    p["b2"] = u(ks[3], (2,), 2 * KSIZE)
    p["w3"] = u(ks[4], (4, 2, KSIZE), 2 * KSIZE)
    p["b3"] = u(ks[5], (4,), 2 * KSIZE)
    p["w4"] = u(ks[6], (4, 4, KSIZE), 4 * KSIZE)
    p["b4"] = u(ks[7], (4,), 4 * KSIZE)
    p["wf"] = u(ks[8], (NUM_CLASSES, 4 * L_QUART), 4 * L_QUART)
    p["bf"] = u(ks[9], (NUM_CLASSES,), 4 * L_QUART)
    return p


if __name__ == "__main__":
    root = jax.random.PRNGKey(0)
    pkey, xkey = jax.random.split(root)
    params = init_params(pkey)
    # Input consistent with x.view(-1, 1, classes * freqpts): (B, 10, 64) -> (B, 1, 640)
    x = jax.random.normal(xkey, (2, NUM_CLASSES, FREQPTS), jnp.float32)

    fwd = jax.jit(make_forward(_detect_roll_toward_higher()))
    out = jax.block_until_ready(fwd(x, params))
    assert out.shape == (2, NUM_CLASSES) and out.dtype == jnp.float32

    ref = jax.block_until_ready(reference_forward(x, params))
    np.testing.assert_allclose(np.asarray(out), np.asarray(ref), rtol=2e-3, atol=2e-3)
    print("KERNEL_OK")
</pallas_src>

<mosaic_0001>
module attributes {stable_mosaic.version = 11 : i64} {
  func.func @probe_kernel(%arg0: memref<8x128xf32, #tpu.memory_space<vmem>>, %arg1: memref<8x128xf32, #tpu.memory_space<vmem>>) attributes {dimension_semantics = [], scalar_prefetch = 0 : i64, scratch_operands = 0 : i64, tpu.core_type = #tpu.core_type<tc>} {
    %c0 = arith.constant 0 : index
    %c0_0 = arith.constant 0 : index
    %0 = vector.load %arg0[%c0, %c0_0] : memref<8x128xf32, #tpu.memory_space<vmem>>, vector<8x128xf32>
    %c1_i32 = arith.constant 1 : i32
    %1 = tpu.dynamic_rotate %0 by %c1_i32 dim 1 : vector<8x128xf32>, i32 -> vector<8x128xf32>
    %c0_1 = arith.constant 0 : index
    %c0_2 = arith.constant 0 : index
    %2 = vector.load %arg1[%c0_1, %c0_2] : memref<8x128xf32, #tpu.memory_space<vmem>>, vector<8x128xf32>
    tpu.vector_store %arg1[%c0_1, %c0_2], %1 {strides = array<i32>} : memref<8x128xf32, #tpu.memory_space<vmem>>, vector<8x128xf32>,
    return
  }
}

</mosaic_0001>

<llo_original>
// kernel: tpu_custom_call.1
$region0: #{tpu_custom_call.1}
  #allocation0 [shape = 'u32[]', space=smem, size = 0x4, offset = 0x4, fixed_abs, tag = 'smem constant byte address 0x4 - core index']
  #allocation1 [shape = 'u32[144,128]{1,0:T(1,128)}', space=vmem, size = 0x12000, scoped, tag = 'internal scratch']
  %s0 = inlined_call_operand.hbm [shape: f32[8,128], index: 0, kind: input, shape index: {}]
  %s1 = inlined_call_operand.hbm [shape: f32[8,128], index: 1, kind: output, shape index: {}]
  %s2 = sld [smem:[#allocation0]]
  $region18: #{tpu_custom_call.1} parent=0
    _
  %s4 = ssub.s32 1, %s2
  %s5 = scalar_select 0, %s4, %s2
  $region1: #{tpu_custom_call.1} parent=0
    #allocation2 [shape = 'u8[4096]{0}', space=vmem, size = 0x1000, scoped, tag = 'input window, operand 0, single buffered']
    #allocation3 [shape = 's32[1]{0}', space=sflag, size = 0x4, scoped, tag = 'scoped memory for tpu_custom_call.1']
    #allocation4 [shape = 's32[1]{0}', space=sflag, size = 0x4, scoped, tag = 'scoped memory for tpu_custom_call.1']
    #allocation5 [shape = 'u8[4096]{0}', space=vmem, size = 0x1000, scoped, tag = 'output window, operand 0, single buffered']
    %6 = vsyncpa [#allocation3], 0
    %7 = vsyncpa [#allocation4], 0
    // Predicated region
    $region2: #{tpu_custom_call.1} parent=1 // pred_check
      _
    $region3: #{tpu_custom_call.1} parent=1 // pred_check_branch
      %9 = sbr.rel (0) target = $region5
    $region4: #{tpu_custom_call.1} parent=1 // pred_region
      %s11 = ssub.s32 128, 128
      %12 = vsyncadd [#allocation3], %s11
      %s14 = sshll.u32 [#allocation2], 4
      %s15 = int_to_ptr.vmem [resolvable:$true] %s14
      %17 = dma.hbm_to_vmem [thread:$0]  %s0, 128, %s15, [#allocation3]
    $region5: #{tpu_custom_call.1} parent=1 // pred_fallthru
      _
    // Predicated region
    $region6: #{tpu_custom_call.1} parent=1 // pred_check
      _
    $region7: #{tpu_custom_call.1} parent=1 // pred_check_branch
      %19 = sbr.rel (0) target = $region9
    $region8: #{tpu_custom_call.1} parent=1 // pred_region
      %20 = dma.done [#allocation3], 128
    $region9: #{tpu_custom_call.1} parent=1 // pred_fallthru
      _
    %v21 = vld [vmem:[#allocation2] sm:$0xff]
    %22 = vrot.lane.b32.xlu0 %v21, 1
    %v23 = vpop.permute.xlu0 %22
    %24 = vst [vmem:[#allocation5] sm:$0xff] %v23
    // Predicated region
    $region10: #{tpu_custom_call.1} parent=1 // pred_check
      _
    $region11: #{tpu_custom_call.1} parent=1 // pred_check_branch
      %26 = sbr.rel (0) target = $region13
    $region12: #{tpu_custom_call.1} parent=1 // pred_region
      %s28 = ssub.s32 128, 128
      %29 = vsyncadd [#allocation4], %s28
      %s31 = sshll.u32 [#allocation5], 4
      %s32 = int_to_ptr.vmem [resolvable:$true] %s31
      %34 = dma.vmem_to_hbm [thread:$0]  %s32, 128, %s1, [#allocation4]
    $region13: #{tpu_custom_call.1} parent=1 // pred_fallthru
      _
    // Predicated region
    $region14: #{tpu_custom_call.1} parent=1 // pred_check
      _
    $region15: #{tpu_custom_call.1} parent=1 // pred_check_branch
      %36 = sbr.rel (0) target = $region17
    $region16: #{tpu_custom_call.1} parent=1 // pred_region
      %37 = dma.done [#allocation4], 128
    $region17: #{tpu_custom_call.1} parent=1 // pred_fallthru
      _
    %38 = vsyncpa [#allocation3], 1
    %39 = vsyncpa [#allocation4], 1

</llo_original>
